<compile_context>
chip_gen: v6e
topology: v6e:2x2x1
jax: 0.10.0
libtpu: 0.0.40
codegen_flags: <defaults>
</compile_context>

<pallas_src>
import math

import jax
import jax.numpy as jnp
from jax.experimental import pallas as pl
from jax.experimental.pallas import tpu as pltpu

D_IN, D_H1, D_H2, D_H3, D_OUT = 4, 128, 64, 32, 1


def _round_up(n, m):
    return ((n + m - 1) // m) * m


def mlp_kernel(xt_ref, w1t_ref, b1_ref, w2t_ref, b2_ref, w34t_ref, b34_ref,
               o_ref):
    # Batch is in lanes throughout: activations are (features, TB).
    # x arrives f32; cast to bf16 here (in-kernel cast is free).  All matmuls
    # accumulate in f32; bias adds / ReLU / sigmoid stay in f32.
    xt = xt_ref[...].astype(jnp.bfloat16)                     # (4, TB)

    # fc1 + ReLU: (128,4) @ (4,TB) -> (128,TB).  K=4 wastes MXU depth, but the
    # kernel is HBM/overhead-bound so the MXU push slot has plenty of slack.
    h1 = jnp.dot(w1t_ref[...], xt, preferred_element_type=jnp.float32)
    h1 = jnp.maximum(h1 + b1_ref[...], 0.0)                   # (128,TB) f32

    # fc2 + ReLU: (64,128) @ (128,TB) -> (64,TB)
    h2 = jnp.dot(w2t_ref[...], h1.astype(jnp.bfloat16),
                 preferred_element_type=jnp.float32)
    h2 = jnp.maximum(h2 + b2_ref[...], 0.0)                   # (64,TB) f32

    # Fused fc3+fc4 (no activation between them): (1,64) @ (64,TB) -> (1,TB)
    z = jnp.dot(w34t_ref[...], h2.astype(jnp.bfloat16),
                preferred_element_type=jnp.float32)
    z = z + b34_ref[...]                                      # (1,TB) f32

    # Numerically stable sigmoid: 0.5*(tanh(z/2)+1).  tanh runs on the EUP
    # (free slot) and saturates cleanly for |z| large -> no overflow/NaN.
    # Lane-dense (1, TB) store -> unmasked vst, minimal writeback.
    o_ref[...] = (0.5 * (jnp.tanh(0.5 * z) + 1.0)).astype(o_ref.dtype)


def mlp_forward(x, params, *, block_b=2048):
    """x: (B, 4) float32; params: weights (in,out) + biases (1,out), all f32."""
    B = x.shape[0]

    # Grid steps: enough to cover B at <= block_b rows/step, and at least 2
    # when the batch is big enough so both v7x TensorCores get work on the
    # "parallel" axis (harmless on single-TC v5e/v6e).
    num_steps = pl.cdiv(B, block_b)
    if B >= 256:
        num_steps = max(num_steps, 2)
    # Lane-dense blocks need TB % 128 == 0; spread rows evenly over the steps
    # so padding waste stays small for awkward B.
    TB = _round_up(pl.cdiv(B, num_steps), 128)
    B_pad = _round_up(B, TB)
    grid = (B_pad // TB,)

    if B_pad != B:
        x = jnp.pad(x, ((0, B_pad - B), (0, 0)))
    # Single wrapper transpose -> batch in lanes; x stays f32 (bf16 cast is
    # done in-kernel).  This is the only extra XLA pass over x.
    xt = x.T                                                  # (4, B_pad) f32

    # Weights transposed to (out, in) and cast to bf16 (tiny, one-time).
    # Biases stay f32 as (out, 1) columns for lane-broadcast adds.
    w1t = params["w1"].T.astype(jnp.bfloat16)                 # (128, 4)
    b1 = params["b1"].reshape(D_H1, 1)                        # (128, 1) f32
    w2t = params["w2"].T.astype(jnp.bfloat16)                 # (64, 128)
    b2 = params["b2"].reshape(D_H2, 1)                        # (64, 1) f32
    # fc3/fc4 fused exactly in f32, then cast once for the MXU.
    w34t = (params["w3"] @ params["w4"]).T.astype(jnp.bfloat16)   # (1, 64)
    b34 = params["b3"] @ params["w4"] + params["b4"]              # (1, 1) f32

    # Weights/biases: constant index map -> fetched once, VMEM-resident.
    resident = lambda a: pl.BlockSpec(a.shape, lambda i: (0,) * a.ndim)

    out = pl.pallas_call(
        mlp_kernel,
        out_shape=jax.ShapeDtypeStruct((1, B_pad), jnp.float32),
        grid=grid,
        in_specs=[
            pl.BlockSpec((D_IN, TB), lambda i: (0, i)),  # x^T tiled over batch lanes
            resident(w1t), resident(b1),
            resident(w2t), resident(b2),
            resident(w34t), resident(b34),
        ],
        out_specs=pl.BlockSpec((1, TB), lambda i: (0, i)),   # lane-dense output
        compiler_params=pltpu.CompilerParams(
            dimension_semantics=("parallel",),               # megacore on v7x
            vmem_limit_bytes=32 * 1024 * 1024,
        ),
    )(xt, w1t, b1, w2t, b2, w34t, b34)

    # (1, B_pad) -> (B, 1): contiguous reshape + tiny slice (4 B/row).
    return out.reshape(-1, 1)[:B]


# --------------------------- init + reference --------------------------------
def xavier_uniform(key, fan_in, fan_out):
    # Matches torch.nn.init.xavier_uniform_ (gain=1) for a (out,in) weight;
    # emitted directly in the transposed (in,out) layout.
    bound = math.sqrt(6.0 / (fan_in + fan_out))
    return jax.random.uniform(key, (fan_in, fan_out), jnp.float32, -bound, bound)


def linear_bias(key, fan_in, fan_out):
    # PyTorch default Linear bias init: U(-1/sqrt(fan_in), 1/sqrt(fan_in)).
    bound = 1.0 / math.sqrt(fan_in)
    return jax.random.uniform(key, (1, fan_out), jnp.float32, -bound, bound)


def init_params(key):
    ks = jax.random.split(key, 8)
    dims = [(D_IN, D_H1), (D_H1, D_H2), (D_H2, D_H3), (D_H3, D_OUT)]
    params = {}
    for i, (fi, fo) in enumerate(dims, start=1):
        params[f"w{i}"] = xavier_uniform(ks[2 * (i - 1)], fi, fo)
        params[f"b{i}"] = linear_bias(ks[2 * (i - 1) + 1], fi, fo)
    return params


def mlp_ref(x, p):
    h = jnp.maximum(x @ p["w1"] + p["b1"], 0.0)
    h = jnp.maximum(h @ p["w2"] + p["b2"], 0.0)
    h = h @ p["w3"] + p["b3"]
    h = h @ p["w4"] + p["b4"]
    return jax.nn.sigmoid(h)


if __name__ == "__main__":
    key = jax.random.PRNGKey(0)
    pkey, xkey, xkey2 = jax.random.split(key, 3)
    params = init_params(pkey)

    # Small case (batch=8, features=4), matching the module's input width.
    x = jax.random.normal(xkey, (8, D_IN), jnp.float32)
    out = jax.block_until_ready(mlp_forward(x, params))
    ref = mlp_ref(x, params)
    assert out.shape == (8, D_OUT)
    # bf16 matmul operands => loose-but-safe tolerance vs f32 reference.
    assert jnp.allclose(out, ref, atol=2e-2, rtol=2e-2)

    # Larger, non-multiple-of-tile batch to exercise the multi-step grid
    # (>= 2 "parallel" steps) and the padding path.
    x_big = jax.random.normal(xkey2, (600, D_IN), jnp.float32)
    out_big = jax.block_until_ready(mlp_forward(x_big, params))
    ref_big = mlp_ref(x_big, params)
    assert out_big.shape == (600, D_OUT)
    assert jnp.allclose(out_big, ref_big, atol=2e-2, rtol=2e-2)

    print("KERNEL_OK")
</pallas_src>

<mosaic_0001>
module attributes {stable_mosaic.version = 11 : i64} {
  func.func @mlp_kernel(%arg0: i32, %arg1: memref<4x128xf32, #tpu.memory_space<vmem>>, %arg2: memref<128x4xbf16, #tpu.memory_space<vmem>>, %arg3: memref<128x1xf32, #tpu.memory_space<vmem>>, %arg4: memref<64x128xbf16, #tpu.memory_space<vmem>>, %arg5: memref<64x1xf32, #tpu.memory_space<vmem>>, %arg6: memref<1x64xbf16, #tpu.memory_space<vmem>>, %arg7: memref<1x1xf32, #tpu.memory_space<vmem>>, %arg8: memref<1x128xf32, #tpu.memory_space<vmem>>) attributes {dimension_semantics = [#tpu.dimension_semantics<parallel>], iteration_bounds = array<i64: 1>, scalar_prefetch = 0 : i64, scratch_operands = 0 : i64, tpu.core_type = #tpu.core_type<tc>, window_params = [{transform_indices = @transform_0, window_bounds = array<i64: 4, 128>}, {pipeline_mode = #tpu.pipeline_mode<synchronous>, transform_indices = @transform_1, window_bounds = array<i64: 128, 4>}, {pipeline_mode = #tpu.pipeline_mode<synchronous>, transform_indices = @transform_2, window_bounds = array<i64: 128, 1>}, {pipeline_mode = #tpu.pipeline_mode<synchronous>, transform_indices = @transform_3, window_bounds = array<i64: 64, 128>}, {pipeline_mode = #tpu.pipeline_mode<synchronous>, transform_indices = @transform_4, window_bounds = array<i64: 64, 1>}, {pipeline_mode = #tpu.pipeline_mode<synchronous>, transform_indices = @transform_5, window_bounds = array<i64: 1, 64>}, {pipeline_mode = #tpu.pipeline_mode<synchronous>, transform_indices = @transform_6, window_bounds = array<i64: 1, 1>}, {transform_indices = @transform_7, window_bounds = array<i64: 1, 128>}]} {
    %c0 = arith.constant 0 : index
    %c0_0 = arith.constant 0 : index
    %0 = vector.load %arg1[%c0, %c0_0] : memref<4x128xf32, #tpu.memory_space<vmem>>, vector<4x128xf32>
    %1 = arith.truncf %0 : vector<4x128xf32> to vector<4x128xbf16>
    %c0_1 = arith.constant 0 : index
    %c0_2 = arith.constant 0 : index
    %2 = vector.load %arg2[%c0_1, %c0_2] : memref<128x4xbf16, #tpu.memory_space<vmem>>, vector<128x4xbf16>
    %cst = arith.constant dense<0.000000e+00> : vector<128x128xf32>
    %3 = tpu.matmul %2, %1, %cst {dimension_numbers = #tpu.dot_dimension_numbers<[1], [0], [0], [1], [0, 0, 1, 1], [], []>} : vector<128x4xbf16>, vector<4x128xbf16>, vector<128x128xf32> -> vector<128x128xf32>
    %c0_3 = arith.constant 0 : index
    %c0_4 = arith.constant 0 : index
    %4 = vector.load %arg3[%c0_3, %c0_4] : memref<128x1xf32, #tpu.memory_space<vmem>>, vector<128x1xf32>
    %5 = vector.broadcast %4 : vector<128x1xf32> to vector<128x128xf32>
    %6 = arith.addf %3, %5 : vector<128x128xf32>
    %cst_5 = arith.constant 0.000000e+00 : f32
    %7 = vector.broadcast %cst_5 : f32 to vector<128x128xf32>
    %8 = arith.maximumf %6, %7 : vector<128x128xf32>
    %c0_6 = arith.constant 0 : index
    %c0_7 = arith.constant 0 : index
    %9 = vector.load %arg4[%c0_6, %c0_7] : memref<64x128xbf16, #tpu.memory_space<vmem>>, vector<64x128xbf16>
    %10 = arith.truncf %8 : vector<128x128xf32> to vector<128x128xbf16>
    %cst_8 = arith.constant dense<0.000000e+00> : vector<64x128xf32>
    %11 = tpu.matmul %9, %10, %cst_8 {dimension_numbers = #tpu.dot_dimension_numbers<[1], [0], [0], [1], [0, 0, 1, 1], [], []>} : vector<64x128xbf16>, vector<128x128xbf16>, vector<64x128xf32> -> vector<64x128xf32>
    %c0_9 = arith.constant 0 : index
    %c0_10 = arith.constant 0 : index
    %12 = vector.load %arg5[%c0_9, %c0_10] : memref<64x1xf32, #tpu.memory_space<vmem>>, vector<64x1xf32>
    %13 = vector.broadcast %12 : vector<64x1xf32> to vector<64x128xf32>
    %14 = arith.addf %11, %13 : vector<64x128xf32>
    %cst_11 = arith.constant 0.000000e+00 : f32
    %15 = vector.broadcast %cst_11 : f32 to vector<64x128xf32>
    %16 = arith.maximumf %14, %15 : vector<64x128xf32>
    %c0_12 = arith.constant 0 : index
    %c0_13 = arith.constant 0 : index
    %17 = vector.load %arg6[%c0_12, %c0_13] : memref<1x64xbf16, #tpu.memory_space<vmem>>, vector<1x64xbf16>
    %18 = arith.truncf %16 : vector<64x128xf32> to vector<64x128xbf16>
    %cst_14 = arith.constant dense<0.000000e+00> : vector<1x128xf32>
    %19 = tpu.matmul %17, %18, %cst_14 {dimension_numbers = #tpu.dot_dimension_numbers<[1], [0], [0], [1], [0, 0, 1, 1], [], []>} : vector<1x64xbf16>, vector<64x128xbf16>, vector<1x128xf32> -> vector<1x128xf32>
    %c0_15 = arith.constant 0 : index
    %c0_16 = arith.constant 0 : index
    %20 = vector.load %arg7[%c0_15, %c0_16] : memref<1x1xf32, #tpu.memory_space<vmem>>, vector<1x1xf32>
    %21 = vector.broadcast %20 : vector<1x1xf32> to vector<1x128xf32>
    %22 = arith.addf %19, %21 : vector<1x128xf32>
    %cst_17 = arith.constant 5.000000e-01 : f32
    %23 = vector.broadcast %cst_17 : f32 to vector<1x128xf32>
    %24 = arith.mulf %23, %22 : vector<1x128xf32>
    %25 = math.tanh %24 : vector<1x128xf32>
    %cst_18 = arith.constant 1.000000e+00 : f32
    %26 = vector.broadcast %cst_18 : f32 to vector<1x128xf32>
    %27 = arith.addf %25, %26 : vector<1x128xf32>
    %cst_19 = arith.constant 5.000000e-01 : f32
    %28 = vector.broadcast %cst_19 : f32 to vector<1x128xf32>
    %29 = arith.mulf %28, %27 : vector<1x128xf32>
    %c0_20 = arith.constant 0 : index
    %c0_21 = arith.constant 0 : index
    %30 = vector.load %arg8[%c0_20, %c0_21] : memref<1x128xf32, #tpu.memory_space<vmem>>, vector<1x128xf32>
    tpu.vector_store %arg8[%c0_20, %c0_21], %29 {strides = array<i32>} : memref<1x128xf32, #tpu.memory_space<vmem>>, vector<1x128xf32>,
    return
  }
  func.func @transform_0(%arg0: i32) -> (i32, i32) {
    %c0_i32 = arith.constant 0 : i32
    %c0_i32_0 = arith.constant 0 : i32
    return %c0_i32, %arg0 : i32, i32
  }
  func.func @transform_1(%arg0: i32) -> (i32, i32) {
    %c0_i32 = arith.constant 0 : i32
    %c0_i32_0 = arith.constant 0 : i32
    %c0_i32_1 = arith.constant 0 : i32
    return %c0_i32, %c0_i32_0 : i32, i32
  }
  func.func @transform_2(%arg0: i32) -> (i32, i32) {
    %c0_i32 = arith.constant 0 : i32
    %c0_i32_0 = arith.constant 0 : i32
    %c0_i32_1 = arith.constant 0 : i32
    return %c0_i32, %c0_i32_0 : i32, i32
  }
  func.func @transform_3(%arg0: i32) -> (i32, i32) {
    %c0_i32 = arith.constant 0 : i32
    %c0_i32_0 = arith.constant 0 : i32
    %c0_i32_1 = arith.constant 0 : i32
    return %c0_i32, %c0_i32_0 : i32, i32
  }
  func.func @transform_4(%arg0: i32) -> (i32, i32) {
    %c0_i32 = arith.constant 0 : i32
    %c0_i32_0 = arith.constant 0 : i32
    %c0_i32_1 = arith.constant 0 : i32
    return %c0_i32, %c0_i32_0 : i32, i32
  }
  func.func @transform_5(%arg0: i32) -> (i32, i32) {
    %c0_i32 = arith.constant 0 : i32
    %c0_i32_0 = arith.constant 0 : i32
    %c0_i32_1 = arith.constant 0 : i32
    return %c0_i32, %c0_i32_0 : i32, i32
  }
  func.func @transform_6(%arg0: i32) -> (i32, i32) {
    %c0_i32 = arith.constant 0 : i32
    %c0_i32_0 = arith.constant 0 : i32
    %c0_i32_1 = arith.constant 0 : i32
    return %c0_i32, %c0_i32_0 : i32, i32
  }
  func.func @transform_7(%arg0: i32) -> (i32, i32) {
    %c0_i32 = arith.constant 0 : i32
    %c0_i32_0 = arith.constant 0 : i32
    return %c0_i32, %arg0 : i32, i32
  }
}

</mosaic_0001>

<llo_original>
// kernel: tpu_custom_call.1
$region0: #{tpu_custom_call.1}
  #allocation0 [shape = 'u32[]', space=smem, size = 0x4, offset = 0x4, fixed_abs, tag = 'smem constant byte address 0x4 - core index']
  #allocation1 [shape = 'u32[144,128]{1,0:T(1,128)}', space=vmem, size = 0x12000, scoped, tag = 'internal scratch']
  #allocation2 [shape = 'f32[1,1]{1,0:T(1,128)S(1)}', space=vmem, size = 0x200, scoped, tag = 'scoped memory for tpu_custom_call.1']
  %s0 = inlined_call_operand.vmem [shape: f32[4,128], index: 0, kind: input, shape index: {}]
  %s1 = inlined_call_operand.vmem [shape: bf16[128,4], index: 1, kind: input, shape index: {}]
  %s2 = inlined_call_operand.vmem [shape: f32[128,1], index: 2, kind: input, shape index: {}]
  %s3 = inlined_call_operand.vmem [shape: bf16[64,128], index: 3, kind: input, shape index: {}]
  %s4 = inlined_call_operand.vmem [shape: f32[64,1], index: 4, kind: input, shape index: {}]
  %s5 = inlined_call_operand.vmem [shape: bf16[1,64], index: 5, kind: input, shape index: {}]
  %s6 = inlined_call_operand.<no memory space> [shape: f32[1,1], index: 6, kind: input, shape index: {}]
  %s7 = inlined_call_operand.hbm [shape: f32[1,128], index: 7, kind: output, shape index: {}]
  %s8 = sld [smem:[#allocation0]]
  $region38: #{tpu_custom_call.1} parent=0
    _
  %s10 = ssub.s32 1, %s8
  %s11 = scalar_select 0, %s10, %s8
  %v12 = vstv %s6
  %13 = vst [vmem:[#allocation2] sm:$0x1] %v12
  $region1: #{tpu_custom_call.1} parent=0
    #allocation3 [shape = 'u8[512]{0}', space=vmem, size = 0x400, scoped, tag = 'output window, operand 0, single buffered']
    #allocation4 [shape = 's32[1]{0}', space=sflag, size = 0x4, scoped, tag = 'scoped memory for tpu_custom_call.1']
    %14 = vsyncpa [#allocation4], 0
    // Predicated region
    $region2: #{tpu_custom_call.1} parent=1 // pred_check
      _
    $region3: #{tpu_custom_call.1} parent=1 // pred_check_branch
      %16 = sbr.rel (0) target = $region5
    $region4: #{tpu_custom_call.1} parent=1 // pred_region
      _
    $region5: #{tpu_custom_call.1} parent=1 // pred_fallthru
      _
    // Predicated region
    $region6: #{tpu_custom_call.1} parent=1 // pred_check
      _
    $region7: #{tpu_custom_call.1} parent=1 // pred_check_branch
      %18 = sbr.rel (0) target = $region9
    $region8: #{tpu_custom_call.1} parent=1 // pred_region
      _
    $region9: #{tpu_custom_call.1} parent=1 // pred_fallthru
      _
    // Predicated region
    $region10: #{tpu_custom_call.1} parent=1 // pred_check
      _
    $region11: #{tpu_custom_call.1} parent=1 // pred_check_branch
      %20 = sbr.rel (0) target = $region13
    $region12: #{tpu_custom_call.1} parent=1 // pred_region
      _
    $region13: #{tpu_custom_call.1} parent=1 // pred_fallthru
      _
    // Predicated region
    $region14: #{tpu_custom_call.1} parent=1 // pred_check
      _
    $region15: #{tpu_custom_call.1} parent=1 // pred_check_branch
      %22 = sbr.rel (0) target = $region17
    $region16: #{tpu_custom_call.1} parent=1 // pred_region
      _
    $region17: #{tpu_custom_call.1} parent=1 // pred_fallthru
      _
    // Predicated region
    $region18: #{tpu_custom_call.1} parent=1 // pred_check
      _
    $region19: #{tpu_custom_call.1} parent=1 // pred_check_branch
      %24 = sbr.rel (0) target = $region21
    $region20: #{tpu_custom_call.1} parent=1 // pred_region
      _
    $region21: #{tpu_custom_call.1} parent=1 // pred_fallthru
      _
    // Predicated region
    $region22: #{tpu_custom_call.1} parent=1 // pred_check
      _
    $region23: #{tpu_custom_call.1} parent=1 // pred_check_branch
      %26 = sbr.rel (0) target = $region25
    $region24: #{tpu_custom_call.1} parent=1 // pred_region
      _
    $region25: #{tpu_custom_call.1} parent=1 // pred_fallthru
      _
    // Predicated region
    $region26: #{tpu_custom_call.1} parent=1 // pred_check
      _
    $region27: #{tpu_custom_call.1} parent=1 // pred_check_branch
      %28 = sbr.rel (0) target = $region29
    $region28: #{tpu_custom_call.1} parent=1 // pred_region
      _
    $region29: #{tpu_custom_call.1} parent=1 // pred_fallthru
      _
    %v30 = vld [vmem:[%s0] sm:$0xf]
    %v31 = vpack.c.bf16 %v30, %v30
    %v32 = vld [vmem:[%s1] sm:$0xf]
    %v33 = vld [vmem:[%s1 + $0x4] sm:$0xf]
    %v34 = vld [vmem:[%s1 + $0x8] sm:$0xf]
    %v35 = vld [vmem:[%s1 + $0xc] sm:$0xf]
    %v36 = vld [vmem:[%s1 + $0x10] sm:$0xf]
    %v37 = vld [vmem:[%s1 + $0x14] sm:$0xf]
    %v38 = vld [vmem:[%s1 + $0x18] sm:$0xf]
    %v39 = vld [vmem:[%s1 + $0x1c] sm:$0xf]
    %v40 = vld [vmem:[%s1 + $0x20] sm:$0xf]
    %v41 = vld [vmem:[%s1 + $0x24] sm:$0xf]
    %v42 = vld [vmem:[%s1 + $0x28] sm:$0xf]
    %v43 = vld [vmem:[%s1 + $0x2c] sm:$0xf]
    %v44 = vld [vmem:[%s1 + $0x30] sm:$0xf]
    %v45 = vld [vmem:[%s1 + $0x34] sm:$0xf]
    %v46 = vld [vmem:[%s1 + $0x38] sm:$0xf]
    %v47 = vld [vmem:[%s1 + $0x3c] sm:$0xf]
    %v48 = vld [vmem:[%s2] sm:$0xff]
    %v49 = vld [vmem:[%s2 + $0x8] sm:$0xff]
    %v50 = vld [vmem:[%s2 + $0x10] sm:$0xff]
    %v51 = vld [vmem:[%s2 + $0x18] sm:$0xff]
    %v52 = vld [vmem:[%s2 + $0x20] sm:$0xff]
    %v53 = vld [vmem:[%s2 + $0x28] sm:$0xff]
    %v54 = vld [vmem:[%s2 + $0x30] sm:$0xff]
    %v55 = vld [vmem:[%s2 + $0x38] sm:$0xff]
    %v56 = vld [vmem:[%s2 + $0x40] sm:$0xff]
    %v57 = vld [vmem:[%s2 + $0x48] sm:$0xff]
    %v58 = vld [vmem:[%s2 + $0x50] sm:$0xff]
    %v59 = vld [vmem:[%s2 + $0x58] sm:$0xff]
    %v60 = vld [vmem:[%s2 + $0x60] sm:$0xff]
    %v61 = vld [vmem:[%s2 + $0x68] sm:$0xff]
    %v62 = vld [vmem:[%s2 + $0x70] sm:$0xff]
    %v63 = vld [vmem:[%s2 + $0x78] sm:$0xff]
    %65 = vset.pattern.permute.xlu0 0
    %66 = vperm.xlu0 %65, %v48
    %v67 = vpop.permute.xlu0 %66
    %70 = vset.pattern.permute.xlu0 0
    %71 = vperm.xlu0 %70, %v49
    %v72 = vpop.permute.xlu0 %71
    %75 = vset.pattern.permute.xlu0 0
    %76 = vperm.xlu0 %75, %v50
    %v77 = vpop.permute.xlu0 %76
    %80 = vset.pattern.permute.xlu0 0
    %81 = vperm.xlu0 %80, %v51
    %v82 = vpop.permute.xlu0 %81
    %85 = vset.pattern.permute.xlu0 0
    %86 = vperm.xlu0 %85, %v52
    %v87 = vpop.permute.xlu0 %86
    %90 = vset.pattern.permute.xlu0 0
    %91 = vperm.xlu0 %90, %v53
    %v92 = vpop.permute.xlu0 %91
    %95 = vset.pattern.permute.xlu0 0
    %96 = vperm.xlu0 %95, %v54
    %v97 = vpop.permute.xlu0 %96
    %100 = vset.pattern.permute.xlu0 0
    %101 = vperm.xlu0 %100, %v55
    %v102 = vpop.permute.xlu0 %101
    %105 = vset.pattern.permute.xlu0 0
    %106 = vperm.xlu0 %105, %v56
    %v107 = vpop.permute.xlu0 %106
    %110 = vset.pattern.permute.xlu0 0
    %111 = vperm.xlu0 %110, %v57
    %v112 = vpop.permute.xlu0 %111
    %115 = vset.pattern.permute.xlu0 0
    %116 = vperm.xlu0 %115, %v58
    %v117 = vpop.permute.xlu0 %116
    %120 = vset.pattern.permute.xlu0 0
    %121 = vperm.xlu0 %120, %v59
    %v122 = vpop.permute.xlu0 %121
    %125 = vset.pattern.permute.xlu0 0
    %126 = vperm.xlu0 %125, %v60
    %v127 = vpop.permute.xlu0 %126
    %130 = vset.pattern.permute.xlu0 0
    %131 = vperm.xlu0 %130, %v61
    %v132 = vpop.permute.xlu0 %131
    %135 = vset.pattern.permute.xlu0 0
    %136 = vperm.xlu0 %135, %v62
    %v137 = vpop.permute.xlu0 %136
    %140 = vset.pattern.permute.xlu0 0
    %141 = vperm.xlu0 %140, %v63
    %v142 = vpop.permute.xlu0 %141
    %v160 = vunpack.c.l.b16 %v32
    %v161 = vunpack.c.l.b16 %v33
    %v162 = vunpack.c.l.b16 %v34
    %v163 = vunpack.c.l.b16 %v35
    %v164 = vunpack.c.l.b16 %v36
    %v165 = vunpack.c.l.b16 %v37
    %v166 = vunpack.c.l.b16 %v38
    %v167 = vunpack.c.l.b16 %v39
    %v168 = vunpack.c.l.b16 %v40
    %v169 = vunpack.c.l.b16 %v41
    %v170 = vunpack.c.l.b16 %v42
    %v171 = vunpack.c.l.b16 %v43
    %v172 = vunpack.c.l.b16 %v44
    %v173 = vunpack.c.l.b16 %v45
    %v174 = vunpack.c.l.b16 %v46
    %v175 = vunpack.c.l.b16 %v47
    %v176 = vpack.c.b16 %v161, %v160
    %v177 = vpack.c.b16 %v163, %v162
    %v178 = vpack.c.b16 %v165, %v164
    %v179 = vpack.c.b16 %v167, %v166
    %v180 = vpack.c.b16 %v169, %v168
    %v181 = vpack.c.b16 %v171, %v170
    %v182 = vpack.c.b16 %v173, %v172
    %v183 = vpack.c.b16 %v175, %v174
    %vm184 = vcmask 31744
    %v186 = vsel %vm184, %v176, 0
    %v189 = vsel %vm184, %v177, 0
    %v192 = vsel %vm184, %v178, 0
    %v195 = vsel %vm184, %v179, 0
    %v198 = vsel %vm184, %v180, 0
    %v201 = vsel %vm184, %v181, 0
    %v204 = vsel %vm184, %v182, 0
    %v207 = vsel %vm184, %v183, 0
    %vm209 = vcmask 1041408
    %v211 = vsel %vm209, %v31, 0
    %213 = vmatprep.subr.bf16.mxu0 0
    %214 = vmatpush1.bf16.msra.mxu0 0
    %215 = vmatprep.subr.bf16.mxu0 0
    %216 = vmatpush1.bf16.msra.mxu0 0
    %217 = vmatprep.subr.bf16.mxu0 0
    %218 = vmatpush1.bf16.msra.mxu0 0
    %219 = vmatprep.subr.bf16.mxu0 0
    %220 = vmatpush1.bf16.msra.mxu0 0
    %221 = vmatprep.subr.bf16.mxu0 0
    %222 = vmatpush1.bf16.msra.mxu0 0
    %223 = vmatprep.subr.bf16.mxu0 0
    %224 = vmatpush1.bf16.msra.mxu0 0
    %225 = vmatprep.subr.bf16.mxu0 0
    %226 = vmatpush1.bf16.msra.mxu0 0
    %227 = vmatprep.subr.bf16.mxu0 0
    %228 = vmatpush1.bf16.msra.mxu0 %v211
    %229 = vmatprep.subr.bf16.mxu0 0
    %230 = vmatpush2.bf16.msra.mxu0 0
    %231 = vmatprep.subr.bf16.mxu0 0
    %232 = vmatpush2.bf16.msra.mxu0 0
    %233 = vmatprep.subr.bf16.mxu0 0
    %234 = vmatpush2.bf16.msra.mxu0 0
    %235 = vmatprep.subr.bf16.mxu0 0
    %236 = vmatpush2.bf16.msra.mxu0 0
    %237 = vmatprep.subr.bf16.mxu0 0
    %238 = vmatpush2.bf16.msra.mxu0 0
    %239 = vmatprep.subr.bf16.mxu0 0
    %240 = vmatpush2.bf16.msra.mxu0 0
    %241 = vmatprep.subr.bf16.mxu0 0
    %242 = vmatpush2.bf16.msra.mxu0 0
    %243 = vmatprep.subr.bf16.mxu0 0
    %244 = vmatpush2.bf16.msra.mxu0 0
    %245 = vmatprep.mubr.bf16.mxu0 0
    %246 = vmatmul.mubr.bf16.gmra.mxu0 %v186
    %v247 = vpop.f32.mrf.mxu0
    %v248 = vadd.f32 %v67, %v247
    %v249 = vpop.f32.mrf.mxu0
    %v250 = vpop.f32.mrf.mxu0
    %v251 = vadd.f32 %v72, %v250
    %v252 = vpop.f32.mrf.mxu0
    %253 = vmatprep.mubr.bf16.mxu0 0
    %254 = vmatmul.mubr.bf16.gmra.mxu0 %v189
    %v255 = vpop.f32.mrf.mxu0
    %v256 = vadd.f32 %v77, %v255
    %v257 = vpop.f32.mrf.mxu0
    %v258 = vpop.f32.mrf.mxu0
    %v259 = vadd.f32 %v82, %v258
    %v260 = vpop.f32.mrf.mxu0
    %261 = vmatprep.mubr.bf16.mxu0 0
    %262 = vmatmul.mubr.bf16.gmra.mxu0 %v192
    %v263 = vpop.f32.mrf.mxu0
    %v264 = vadd.f32 %v87, %v263
    %v265 = vpop.f32.mrf.mxu0
    %v266 = vpop.f32.mrf.mxu0
    %v267 = vadd.f32 %v92, %v266
    %v268 = vpop.f32.mrf.mxu0
    %269 = vmatprep.mubr.bf16.mxu0 0
    %270 = vmatmul.mubr.bf16.gmra.mxu0 %v195
    %v271 = vpop.f32.mrf.mxu0
    %v272 = vadd.f32 %v97, %v271
    %v273 = vpop.f32.mrf.mxu0
    %v274 = vpop.f32.mrf.mxu0
    %v275 = vadd.f32 %v102, %v274
    %v276 = vpop.f32.mrf.mxu0
    %277 = vmatprep.mubr.bf16.mxu0 0
    %278 = vmatmul.mubr.bf16.gmra.mxu0 %v198
    %v279 = vpop.f32.mrf.mxu0
    %v280 = vadd.f32 %v107, %v279
    %v281 = vpop.f32.mrf.mxu0
    %v282 = vpop.f32.mrf.mxu0
    %v283 = vadd.f32 %v112, %v282
    %v284 = vpop.f32.mrf.mxu0
    %285 = vmatprep.mubr.bf16.mxu0 0
    %286 = vmatmul.mubr.bf16.gmra.mxu0 %v201
    %v287 = vpop.f32.mrf.mxu0
    %v288 = vadd.f32 %v117, %v287
    %v289 = vpop.f32.mrf.mxu0
    %v290 = vpop.f32.mrf.mxu0
    %v291 = vadd.f32 %v122, %v290
    %v292 = vpop.f32.mrf.mxu0
    %293 = vmatprep.mubr.bf16.mxu0 0
    %294 = vmatmul.mubr.bf16.gmra.mxu0 %v204
    %v295 = vpop.f32.mrf.mxu0
    %v296 = vadd.f32 %v127, %v295
    %v297 = vpop.f32.mrf.mxu0
    %v298 = vpop.f32.mrf.mxu0
    %v299 = vadd.f32 %v132, %v298
    %v300 = vpop.f32.mrf.mxu0
    %301 = vmatprep.mubr.bf16.mxu0 0
    %302 = vmatmul.mubr.bf16.gmra.mxu0 %v207
    %v303 = vpop.f32.mrf.mxu0
    %v304 = vadd.f32 %v137, %v303
    %v305 = vpop.f32.mrf.mxu0
    %v306 = vpop.f32.mrf.mxu0
    %v307 = vadd.f32 %v142, %v306
    %v308 = vpop.f32.mrf.mxu0
    %309 = vdwg.mxu0
    %v310 = vmax.f32 %v248, 0.0
    %v311 = vmax.f32 %v251, 0.0
    %v312 = vmax.f32 %v256, 0.0
    %v313 = vmax.f32 %v259, 0.0
    %v314 = vmax.f32 %v264, 0.0
    %v315 = vmax.f32 %v267, 0.0
    %v316 = vmax.f32 %v272, 0.0
    %v317 = vmax.f32 %v275, 0.0
    %v318 = vmax.f32 %v280, 0.0
    %v319 = vmax.f32 %v283, 0.0
    %v320 = vmax.f32 %v288, 0.0
    %v321 = vmax.f32 %v291, 0.0
    %v322 = vmax.f32 %v296, 0.0
    %v323 = vmax.f32 %v299, 0.0
    %v324 = vmax.f32 %v304, 0.0
    %v325 = vmax.f32 %v307, 0.0
    %v326 = vld [vmem:[%s3] sm:$0xf]
    %v327 = vld [vmem:[%s3 + $0x4] sm:$0xf]
    %v328 = vld [vmem:[%s3 + $0x8] sm:$0xf]
    %v329 = vld [vmem:[%s3 + $0xc] sm:$0xf]
    %v330 = vld [vmem:[%s3 + $0x10] sm:$0xf]
    %v331 = vld [vmem:[%s3 + $0x14] sm:$0xf]
    %v332 = vld [vmem:[%s3 + $0x18] sm:$0xf]
    %v333 = vld [vmem:[%s3 + $0x1c] sm:$0xf]
    %v334 = vpack.c.bf16 %v311, %v310
    %v335 = vpack.c.bf16 %v313, %v312
    %v336 = vpack.c.bf16 %v315, %v314
    %v337 = vpack.c.bf16 %v317, %v316
    %v338 = vpack.c.bf16 %v319, %v318
    %v339 = vpack.c.bf16 %v321, %v320
    %v340 = vpack.c.bf16 %v323, %v322
    %v341 = vpack.c.bf16 %v325, %v324
    %v342 = vld [vmem:[%s4] sm:$0xff]
    %v343 = vld [vmem:[%s4 + $0x8] sm:$0xff]
    %v344 = vld [vmem:[%s4 + $0x10] sm:$0xff]
    %v345 = vld [vmem:[%s4 + $0x18] sm:$0xff]
    %v346 = vld [vmem:[%s4 + $0x20] sm:$0xff]
    %v347 = vld [vmem:[%s4 + $0x28] sm:$0xff]
    %v348 = vld [vmem:[%s4 + $0x30] sm:$0xff]
    %v349 = vld [vmem:[%s4 + $0x38] sm:$0xff]
    %351 = vset.pattern.permute.xlu0 0
    %352 = vperm.xlu0 %351, %v342
    %v353 = vpop.permute.xlu0 %352
    %356 = vset.pattern.permute.xlu0 0
    %357 = vperm.xlu0 %356, %v343
    %v358 = vpop.permute.xlu0 %357
    %361 = vset.pattern.permute.xlu0 0
    %362 = vperm.xlu0 %361, %v344
    %v363 = vpop.permute.xlu0 %362
    %366 = vset.pattern.permute.xlu0 0
    %367 = vperm.xlu0 %366, %v345
    %v368 = vpop.permute.xlu0 %367
    %371 = vset.pattern.permute.xlu0 0
    %372 = vperm.xlu0 %371, %v346
    %v373 = vpop.permute.xlu0 %372
    %376 = vset.pattern.permute.xlu0 0
    %377 = vperm.xlu0 %376, %v347
    %v378 = vpop.permute.xlu0 %377
    %381 = vset.pattern.permute.xlu0 0
    %382 = vperm.xlu0 %381, %v348
    %v383 = vpop.permute.xlu0 %382
    %386 = vset.pattern.permute.xlu0 0
    %387 = vperm.xlu0 %386, %v349
    %v388 = vpop.permute.xlu0 %387
    %v398 = vunpack.c.l.b16 %v326
    %v399 = vunpack.c.l.b16 %v327
    %v400 = vunpack.c.l.b16 %v328
    %v401 = vunpack.c.l.b16 %v329
    %v402 = vunpack.c.l.b16 %v330
    %v403 = vunpack.c.l.b16 %v331
    %v404 = vunpack.c.l.b16 %v332
    %v405 = vunpack.c.l.b16 %v333
    %v406 = vpack.c.b16 %v399, %v398
    %v407 = vpack.c.b16 %v401, %v400
    %v408 = vpack.c.b16 %v403, %v402
    %v409 = vpack.c.b16 %v405, %v404
    %414 = vmatprep.subr.bf16.mxu0 0
    %415 = vmatpush1.bf16.msra.mxu0 %v341
    %416 = vmatprep.subr.bf16.mxu0 0
    %417 = vmatpush1.bf16.msra.mxu0 %v340
    %418 = vmatprep.subr.bf16.mxu0 0
    %419 = vmatpush1.bf16.msra.mxu0 %v339
    %420 = vmatprep.subr.bf16.mxu0 0
    %421 = vmatpush1.bf16.msra.mxu0 %v338
    %422 = vmatprep.subr.bf16.mxu0 0
    %423 = vmatpush1.bf16.msra.mxu0 %v337
    %424 = vmatprep.subr.bf16.mxu0 0
    %425 = vmatpush1.bf16.msra.mxu0 %v336
    %426 = vmatprep.subr.bf16.mxu0 0
    %427 = vmatpush1.bf16.msra.mxu0 %v335
    %428 = vmatprep.subr.bf16.mxu0 0
    %429 = vmatpush1.bf16.msra.mxu0 %v334
    %430 = vmatprep.subr.bf16.mxu0 0
    %431 = vmatpush2.bf16.msra.mxu0 0
    %432 = vmatprep.subr.bf16.mxu0 0
    %433 = vmatpush2.bf16.msra.mxu0 0
    %434 = vmatprep.subr.bf16.mxu0 0
    %435 = vmatpush2.bf16.msra.mxu0 0
    %436 = vmatprep.subr.bf16.mxu0 0
    %437 = vmatpush2.bf16.msra.mxu0 0
    %438 = vmatprep.subr.bf16.mxu0 0
    %439 = vmatpush2.bf16.msra.mxu0 0
    %440 = vmatprep.subr.bf16.mxu0 0
    %441 = vmatpush2.bf16.msra.mxu0 0
    %442 = vmatprep.subr.bf16.mxu0 0
    %443 = vmatpush2.bf16.msra.mxu0 0
    %444 = vmatprep.subr.bf16.mxu0 0
    %445 = vmatpush2.bf16.msra.mxu0 0
    %446 = vmatprep.mubr.bf16.mxu0 0
    %447 = vmatmul.mubr.bf16.gmra.mxu0 %v406
    %v448 = vpop.f32.mrf.mxu0
    %v449 = vadd.f32 %v353, %v448
    %v450 = vpop.f32.mrf.mxu0
    %v451 = vpop.f32.mrf.mxu0
    %v452 = vadd.f32 %v358, %v451
    %v453 = vpop.f32.mrf.mxu0
    %454 = vmatprep.mubr.bf16.mxu0 0
    %455 = vmatmul.mubr.bf16.gmra.mxu0 %v407
    %v456 = vpop.f32.mrf.mxu0
    %v457 = vadd.f32 %v363, %v456
    %v458 = vpop.f32.mrf.mxu0
    %v459 = vpop.f32.mrf.mxu0
    %v460 = vadd.f32 %v368, %v459
    %v461 = vpop.f32.mrf.mxu0
    %462 = vmatprep.mubr.bf16.mxu0 0
    %463 = vmatmul.mubr.bf16.gmra.mxu0 %v408
    %v464 = vpop.f32.mrf.mxu0
    %v465 = vadd.f32 %v373, %v464
    %v466 = vpop.f32.mrf.mxu0
    %v467 = vpop.f32.mrf.mxu0
    %v468 = vadd.f32 %v378, %v467
    %v469 = vpop.f32.mrf.mxu0
    %470 = vmatprep.mubr.bf16.mxu0 0
    %471 = vmatmul.mubr.bf16.gmra.mxu0 %v409
    %v472 = vpop.f32.mrf.mxu0
    %v473 = vadd.f32 %v383, %v472
    %v474 = vpop.f32.mrf.mxu0
    %v475 = vpop.f32.mrf.mxu0
    %v476 = vadd.f32 %v388, %v475
    %v477 = vpop.f32.mrf.mxu0
    %478 = vdwg.mxu0
    %v479 = vmax.f32 %v449, 0.0
    %v480 = vmax.f32 %v452, 0.0
    %v481 = vmax.f32 %v457, 0.0
    %v482 = vmax.f32 %v460, 0.0
    %v483 = vmax.f32 %v465, 0.0
    %v484 = vmax.f32 %v468, 0.0
    %v485 = vmax.f32 %v473, 0.0
    %v486 = vmax.f32 %v476, 0.0
    %v487 = vld [vmem:[%s5] sm:$0x1]
    %v488 = vpack.c.bf16 %v480, %v479
    %v489 = vpack.c.bf16 %v482, %v481
    %v490 = vpack.c.bf16 %v484, %v483
    %v491 = vpack.c.bf16 %v486, %v485
    %v492 = vld [vmem:[#allocation2] sm:$0x1]
    %494 = vset.pattern.permute.xlu0 0
    %495 = vperm.xlu0 %494, %v492
    %v496 = vpop.permute.xlu0 %495
    %v498 = vlaneseq
    %v499 = vshrl.u32 %v498, 7
    %v500 = vsub.s32 0, %v499
    %v501 = vrot.slane %v496, %v500
    %vm502 = vcmask 523264
    %v504 = vsel %vm502, %v487, 0
    %506 = vmatprep.subr.bf16.mxu0 0
    %507 = vmatpush1.bf16.msra.mxu0 0
    %508 = vmatprep.subr.bf16.mxu0 0
    %509 = vmatpush1.bf16.msra.mxu0 0
    %510 = vmatprep.subr.bf16.mxu0 0
    %511 = vmatpush1.bf16.msra.mxu0 0
    %512 = vmatprep.subr.bf16.mxu0 0
    %513 = vmatpush1.bf16.msra.mxu0 0
    %514 = vmatprep.subr.bf16.mxu0 0
    %515 = vmatpush1.bf16.msra.mxu0 %v491
    %516 = vmatprep.subr.bf16.mxu0 0
    %517 = vmatpush1.bf16.msra.mxu0 %v490
    %518 = vmatprep.subr.bf16.mxu0 0
    %519 = vmatpush1.bf16.msra.mxu0 %v489
    %520 = vmatprep.subr.bf16.mxu0 0
    %521 = vmatpush1.bf16.msra.mxu0 %v488
    %522 = vmatprep.subr.bf16.mxu0 0
    %523 = vmatpush2.bf16.msra.mxu0 0
    %524 = vmatprep.subr.bf16.mxu0 0
    %525 = vmatpush2.bf16.msra.mxu0 0
    %526 = vmatprep.subr.bf16.mxu0 0
    %527 = vmatpush2.bf16.msra.mxu0 0
    %528 = vmatprep.subr.bf16.mxu0 0
    %529 = vmatpush2.bf16.msra.mxu0 0
    %530 = vmatprep.subr.bf16.mxu0 0
    %531 = vmatpush2.bf16.msra.mxu0 0
    %532 = vmatprep.subr.bf16.mxu0 0
    %533 = vmatpush2.bf16.msra.mxu0 0
    %534 = vmatprep.subr.bf16.mxu0 0
    %535 = vmatpush2.bf16.msra.mxu0 0
    %536 = vmatprep.subr.bf16.mxu0 0
    %537 = vmatpush2.bf16.msra.mxu0 0
    %538 = vmatprep.mubr.bf16.mxu0 0
    %539 = vmatmul.mubr.bf16.gmra.mxu0 %v504
    %v540 = vpop.f32.mrf.mxu0
    %v541 = vadd.f32 %v501, %v540
    %v542 = vpop.f32.mrf.mxu0
    %v543 = vpop.f32.mrf.mxu0
    %v544 = vpop.f32.mrf.mxu0
    %545 = vdwg.mxu0
    %v546 = vmul.f32 %v541, 0.5
    %v547 = vtanh.pop %v546
    %v548 = vadd.f32 %v547, 1.0
    %v549 = vmul.f32 %v548, 0.5
    %550 = vst [vmem:[#allocation3] sm:$0x1] %v549
    // Predicated region
    $region30: #{tpu_custom_call.1} parent=1 // pred_check
      _
    $region31: #{tpu_custom_call.1} parent=1 // pred_check_branch
      %552 = sbr.rel (0) target = $region33
    $region32: #{tpu_custom_call.1} parent=1 // pred_region
      %s554 = ssub.s32 16, 16
      %555 = vsyncadd [#allocation4], %s554
      %s557 = sshll.u32 [#allocation3], 4
      %s558 = int_to_ptr.vmem [resolvable:$true] %s557
      %560 = dma.vmem_to_hbm [thread:$0]  %s558, 16, %s7, [#allocation4]
    $region33: #{tpu_custom_call.1} parent=1 // pred_fallthru
      _
    // Predicated region
    $region34: #{tpu_custom_call.1} parent=1 // pred_check
      _
    $region35: #{tpu_custom_call.1} parent=1 // pred_check_branch
      %562 = sbr.rel (0) target = $region37
    $region36: #{tpu_custom_call.1} parent=1 // pred_region
      %563 = dma.done [#allocation4], 16
    $region37: #{tpu_custom_call.1} parent=1 // pred_fallthru
      _
    %564 = vsyncpa [#allocation4], 1

</llo_original>
